<compile_context>
chip_gen: v7x
topology: tpu7x:2x2x1
jax: 0.10.0
libtpu: 0.0.40
codegen_flags: <defaults>
</compile_context>

<pallas_src>
import jax
import jax.numpy as jnp
from jax.experimental import pallas as pl
from jax.experimental.pallas import tpu as pltpu


def _sigmoid_kernel(x_ref, o_ref):
    # f32 compute, narrow I/O: HBM traffic (the real cost) stays at input width.
    x = x_ref[...].astype(jnp.float32)
    d = 1.0 + jnp.exp(-x)                 # exp on the EUP slot
    r = pl.reciprocal(d, approx=True)     # EUP vrcp, keeps VALU slots free
    r = r * (2.0 - d * r)                 # one Newton step -> full f32 accuracy
    o_ref[...] = r.astype(o_ref.dtype)


def _min_sublane(dtype) -> int:
    """Minimum second-to-last block dim given the dtype's sublane packing."""
    itemsize = jnp.dtype(dtype).itemsize
    if itemsize >= 4:
        return 8
    if itemsize == 2:
        return 16
    return 32


def _vmem_capacity_bytes() -> int:
    """Physical VMEM per core; conservative fallback if the query is unavailable."""
    try:
        return int(pltpu.get_tpu_info().vmem_capacity_bytes)
    except Exception:
        return 64 * 1024 * 1024  # v7x per-TC size: safe lower bound everywhere


def _pick_block_rows(rows: int, lanes: int, itemsize: int, sub: int,
                     per_buffer_bytes: int) -> int:
    """Row tile: large (DMA efficiency), VMEM-safe, >=4 grid steps when the
    tensor is big enough, snapped to a divisor of `rows` (no masked tail block)
    and preferring an even grid-step count (balanced v7x megacore sharding)."""
    target = max(sub, per_buffer_bytes // (lanes * itemsize))
    target = max(sub, (target // sub) * sub)

    # Guarantee >= ~4 grid steps so double buffering overlaps DMA-in / compute
    # / DMA-out for mid-size tensors (a 1-2 step grid serializes them).
    if rows > 2 * sub:
        quarter = -(-rows // 4)
        quarter = max(sub, -(-quarter // sub) * sub)
        target = min(target, quarter)

    if rows <= target:
        return rows  # single full-extent block: always a legal block shape

    # Search downward (multiples of sub, within ~2x of target) for a divisor
    # of rows; prefer one yielding an even number of grid steps.
    lo = max(sub, ((target // 2) // sub) * sub)
    even_pick = None
    any_pick = None
    cand = target
    while cand >= lo:
        if rows % cand == 0:
            if any_pick is None:
                any_pick = cand
            if (rows // cand) % 2 == 0:
                even_pick = cand
                break
        cand -= sub
    if even_pick is not None:
        return even_pick
    if any_pick is not None:
        return any_pick
    return target


def _launch_sigmoid(x2d: jax.Array) -> jax.Array:
    rows, lanes = x2d.shape
    dtype = x2d.dtype
    itemsize = jnp.dtype(dtype).itemsize
    sub = _min_sublane(dtype)

    vmem_cap = _vmem_capacity_bytes()
    # in + out, double buffered => 4 resident tiles. Keep the 4-tile total at
    # <= ~3/8 of physical VMEM (24 MiB on v7x, 48 MiB on v5e/v6e) and each
    # buffer at <= 8 MiB.
    per_buffer = min(8 * 1024 * 1024, max(512 * 1024, (3 * vmem_cap // 8) // 4))
    vmem_limit = int(min(vmem_cap // 2, 64 * 1024 * 1024))

    block_rows = _pick_block_rows(rows, lanes, itemsize, sub, per_buffer)
    grid = (pl.cdiv(rows, block_rows),)

    n_elem = rows * lanes
    cost = pl.CostEstimate(
        flops=4 * n_elem,
        transcendentals=n_elem,
        bytes_accessed=2 * n_elem * itemsize,
    )

    return pl.pallas_call(
        _sigmoid_kernel,
        out_shape=jax.ShapeDtypeStruct((rows, lanes), dtype),
        grid=grid,
        in_specs=[pl.BlockSpec((block_rows, lanes), lambda i: (i, 0))],
        out_specs=pl.BlockSpec((block_rows, lanes), lambda i: (i, 0)),
        compiler_params=pltpu.CompilerParams(
            # Tiles are independent -> shard across both TensorCores on v7x;
            # harmless on single-TC v5e/v6e.
            dimension_semantics=("parallel",),
            vmem_limit_bytes=vmem_limit,
        ),
        cost_estimate=cost,
    )(x2d)


def tudui2_forward(x: jax.Array) -> jax.Array:
    """Forward pass of Tudui2: output = sigmoid(input). Layout-preserving (NCHW)."""
    orig_shape = x.shape
    dtype = x.dtype
    n_elem = int(x.size)
    sub = _min_sublane(dtype)

    # Widest lane-dense last dim (multiple of 128, <= 2048) that exactly
    # divides the element count; gcd-style downward search so non-power-of-2
    # multiples of 128 (384, 640, ...) also hit the fast path.
    lanes = None
    if n_elem >= 128 and n_elem % 128 == 0:
        cand = (min(n_elem, 2048) // 128) * 128
        while cand >= 128:
            if n_elem % cand == 0:
                lanes = cand
                break
            cand -= 128

    if lanes is not None:
        # Fast path: pure reshape (no extra HBM passes), tiled pipelined grid.
        rows = n_elem // lanes
        out2d = _launch_sigmoid(jnp.reshape(x, (rows, lanes)))
        return jnp.reshape(out2d, orig_shape)

    # Cold path (element count not a multiple of 128): pad to a lane-dense slab.
    # TODO(synk): handle the ragged tail with a masked last block inside the
    # same pallas_call to avoid the extra pad/slice HBM passes.
    lanes = 128
    rows = -(-n_elem // lanes)
    rows = -(-rows // sub) * sub
    total = rows * lanes
    x_flat = jnp.pad(jnp.reshape(x, (-1,)), (0, total - n_elem))
    out2d = _launch_sigmoid(jnp.reshape(x_flat, (rows, lanes)))
    out_flat = jnp.reshape(out2d, (-1,))[:n_elem]
    return jnp.reshape(out_flat, orig_shape)


if __name__ == "__main__":
    key = jax.random.PRNGKey(0)
    k1, k2, k3 = jax.random.split(key, 3)

    # Mirrors: input = torch.reshape(input, (-1, 1, 2, 2))
    # Fast path (element count divisible by 128), f32.
    x_main = jax.random.normal(k1, (512, 1, 2, 2), dtype=jnp.float32)
    out_main = jax.block_until_ready(tudui2_forward(x_main))
    ref_main = jax.nn.sigmoid(x_main)
    assert out_main.shape == x_main.shape
    assert out_main.dtype == x_main.dtype
    assert jnp.allclose(out_main, ref_main, atol=5e-6), "f32 mismatch vs reference"

    # Cold path (odd batch -> element count not a multiple of 128).
    x_odd = jax.random.normal(k2, (13, 1, 2, 2), dtype=jnp.float32)
    out_odd = jax.block_until_ready(tudui2_forward(x_odd))
    ref_odd = jax.nn.sigmoid(x_odd)
    assert out_odd.shape == x_odd.shape
    assert jnp.allclose(out_odd, ref_odd, atol=5e-6), "odd-size mismatch vs reference"

    # bf16 I/O (16-sublane minimum) with f32 in-kernel compute.
    x_bf16 = jax.random.normal(k3, (256, 1, 2, 2), dtype=jnp.bfloat16)
    out_bf16 = jax.block_until_ready(tudui2_forward(x_bf16))
    ref_bf16 = jax.nn.sigmoid(x_bf16.astype(jnp.float32)).astype(jnp.bfloat16)
    assert out_bf16.shape == x_bf16.shape
    assert out_bf16.dtype == x_bf16.dtype
    assert jnp.allclose(
        out_bf16.astype(jnp.float32), ref_bf16.astype(jnp.float32), atol=1e-2
    ), "bf16 mismatch vs reference"

    print("KERNEL_OK")
</pallas_src>

<mosaic_0001>
module attributes {stable_mosaic.version = 11 : i64} {
  func.func @_sigmoid_kernel(%arg0: i32, %arg1: memref<1x2048xf32, #tpu.memory_space<vmem>>, %arg2: memref<1x2048xf32, #tpu.memory_space<vmem>>) attributes {dimension_semantics = [#tpu.dimension_semantics<parallel>], iteration_bounds = array<i64: 1>, scalar_prefetch = 0 : i64, scratch_operands = 0 : i64, tpu.core_type = #tpu.core_type<tc>, window_params = [{transform_indices = @transform_0, window_bounds = array<i64: 1, 2048>}, {transform_indices = @transform_1, window_bounds = array<i64: 1, 2048>}]} {
    %c0 = arith.constant 0 : index
    %c0_0 = arith.constant 0 : index
    %0 = vector.load %arg1[%c0, %c0_0] : memref<1x2048xf32, #tpu.memory_space<vmem>>, vector<1x2048xf32>
    %cst = arith.constant 0.000000e+00 : f32
    %1 = vector.broadcast %cst : f32 to vector<1x2048xf32>
    %2 = arith.subf %1, %0 : vector<1x2048xf32>
    %3 = math.exp %2 : vector<1x2048xf32>
    %cst_1 = arith.constant 1.000000e+00 : f32
    %4 = vector.broadcast %cst_1 : f32 to vector<1x2048xf32>
    %5 = arith.addf %4, %3 : vector<1x2048xf32>
    %6 = tpu.reciprocal %5 {approx = true} : vector<1x2048xf32> -> vector<1x2048xf32>
    %7 = arith.mulf %5, %6 : vector<1x2048xf32>
    %cst_2 = arith.constant 2.000000e+00 : f32
    %8 = vector.broadcast %cst_2 : f32 to vector<1x2048xf32>
    %9 = arith.subf %8, %7 : vector<1x2048xf32>
    %10 = arith.mulf %6, %9 : vector<1x2048xf32>
    %c0_3 = arith.constant 0 : index
    %c0_4 = arith.constant 0 : index
    %11 = vector.load %arg2[%c0_3, %c0_4] : memref<1x2048xf32, #tpu.memory_space<vmem>>, vector<1x2048xf32>
    tpu.vector_store %arg2[%c0_3, %c0_4], %10 {strides = array<i32>} : memref<1x2048xf32, #tpu.memory_space<vmem>>, vector<1x2048xf32>,
    return
  }
  func.func @transform_0(%arg0: i32) -> (i32, i32) {
    %c0_i32 = arith.constant 0 : i32
    %c0_i32_0 = arith.constant 0 : i32
    return %arg0, %c0_i32 : i32, i32
  }
  func.func @transform_1(%arg0: i32) -> (i32, i32) {
    %c0_i32 = arith.constant 0 : i32
    %c0_i32_0 = arith.constant 0 : i32
    return %arg0, %c0_i32 : i32, i32
  }
}

</mosaic_0001>

<llo_original>
// kernel: tpu_custom_call.1
$region0: #{tpu_custom_call.1}
  #allocation0 [shape = 'u32[]', space=smem, size = 0x4, offset = 0x4, fixed_abs, tag = 'smem constant byte address 0x4 - core index']
  #allocation1 [shape = 'u32[144,128]{1,0:T(1,128)}', space=vmem, size = 0x12000, scoped, tag = 'internal scratch']
  %s0 = inlined_call_operand.hbm [shape: f32[1,2048], index: 0, kind: input, shape index: {}]
  %s1 = inlined_call_operand.hbm [shape: f32[1,2048], index: 1, kind: output, shape index: {}]
  %s2 = sld [smem:[#allocation0]]
  $region18: #{tpu_custom_call.1} parent=0
    _
  %s4 = ssub.s32 1, %s2
  %s5 = scalar_select 0, %s4, %s2
  $region1: #{tpu_custom_call.1} parent=0
    #allocation2 [shape = 'u8[8192]{0}', space=vmem, size = 0x2000, scoped, tag = 'input window, operand 0, single buffered']
    #allocation3 [shape = 's32[1]{0}', space=sflag, size = 0x4, scoped, tag = 'scoped memory for tpu_custom_call.1']
    #allocation4 [shape = 's32[1]{0}', space=sflag, size = 0x4, scoped, tag = 'scoped memory for tpu_custom_call.1']
    #allocation5 [shape = 'u8[8192]{0}', space=vmem, size = 0x2000, scoped, tag = 'output window, operand 0, single buffered']
    %6 = vsyncpa [#allocation3], 0
    %7 = vsyncpa [#allocation4], 0
    // Predicated region
    $region2: #{tpu_custom_call.1} parent=1 // pred_check
      _
    $region3: #{tpu_custom_call.1} parent=1 // pred_check_branch
      %9 = sbr.rel (0) target = $region5
    $region4: #{tpu_custom_call.1} parent=1 // pred_region
      %s11 = ssub.s32 256, 256
      %12 = vsyncadd [#allocation3], %s11
      %s14 = sshll.u32 [#allocation2], 4
      %s15 = int_to_ptr.vmem [resolvable:$true] %s14
      %17 = dma.hbm_to_vmem [thread:$0]  %s0, 256, %s15, [#allocation3]
    $region5: #{tpu_custom_call.1} parent=1 // pred_fallthru
      _
    // Predicated region
    $region6: #{tpu_custom_call.1} parent=1 // pred_check
      _
    $region7: #{tpu_custom_call.1} parent=1 // pred_check_branch
      %19 = sbr.rel (0) target = $region9
    $region8: #{tpu_custom_call.1} parent=1 // pred_region
      %20 = dma.done [#allocation3], 256
    $region9: #{tpu_custom_call.1} parent=1 // pred_fallthru
      _
    %v21 = vld [vmem:[#allocation2] sm:$0xff]
    %v22 = vld [vmem:[#allocation2 + $0x8] sm:$0xff]
    %v23 = vsub.f32 0.0, %v21
    %v24 = vsub.f32 0.0, %v22
    %v25 = vmul.f32 %v23, 1.442695
    %v26 = vpow.pop %v25
    %v27 = vmul.f32 %v24, 1.442695
    %v28 = vpow.pop %v27
    %v29 = vadd.f32 %v26, 1.0
    %v30 = vadd.f32 %v28, 1.0
    %v31 = vrcp.pop %v29
    %v32 = vrcp.pop %v30
    %v33 = vmul.f32 %v29, %v31
    %v34 = vmul.f32 %v30, %v32
    %v35 = vsub.f32 2.0, %v33
    %v36 = vsub.f32 2.0, %v34
    %v37 = vmul.f32 %v31, %v35
    %v38 = vmul.f32 %v32, %v36
    %39 = vst [vmem:[#allocation5] sm:$0xff] %v37
    %40 = vst [vmem:[#allocation5 + $0x8] sm:$0xff] %v38
    // Predicated region
    $region10: #{tpu_custom_call.1} parent=1 // pred_check
      _
    $region11: #{tpu_custom_call.1} parent=1 // pred_check_branch
      %42 = sbr.rel (0) target = $region13
    $region12: #{tpu_custom_call.1} parent=1 // pred_region
      %s44 = ssub.s32 256, 256
      %45 = vsyncadd [#allocation4], %s44
      %s47 = sshll.u32 [#allocation5], 4
      %s48 = int_to_ptr.vmem [resolvable:$true] %s47
      %50 = dma.vmem_to_hbm [thread:$0]  %s48, 256, %s1, [#allocation4]
    $region13: #{tpu_custom_call.1} parent=1 // pred_fallthru
      _
    // Predicated region
    $region14: #{tpu_custom_call.1} parent=1 // pred_check
      _
    $region15: #{tpu_custom_call.1} parent=1 // pred_check_branch
      %52 = sbr.rel (0) target = $region17
    $region16: #{tpu_custom_call.1} parent=1 // pred_region
      %53 = dma.done [#allocation4], 256
    $region17: #{tpu_custom_call.1} parent=1 // pred_fallthru
      _
    %54 = vsyncpa [#allocation3], 1
    %55 = vsyncpa [#allocation4], 1

</llo_original>
